<compile_context>
chip_gen: v7x
topology: tpu7x:2x2x1
jax: 0.10.0
libtpu: 0.0.40
codegen_flags: <defaults>
</compile_context>

<pallas_src>
import math
import jax
import jax.numpy as jnp
from jax.experimental import pallas as pl
from jax.experimental.pallas import tpu as pltpu

VOCAB_SIZE = 16
D_MODEL = 6
D_PAD = 128      # lane-dense padded embedding width
TN = 8           # tokens per output block (sublane-aligned)


def _embedding_kernel(ids_ref, table_ref, out_ref):
    # ids_ref:   (N_pad,)        int32 in SMEM (scalar prefetch)
    # table_ref: (VOCAB, D_PAD)  f32   in VMEM (resident, tiny)
    # out_ref:   (TN, D_PAD)     f32   output block
    base = pl.program_id(0) * TN
    scale = jnp.float32(math.sqrt(D_MODEL))
    for j in range(TN):                       # short, fully unrolled gather loop
        idx = ids_ref[base + j]               # scalar read from SMEM
        row = table_ref[pl.ds(idx, 1), :]     # (1, D_PAD) dynamic row gather
        out_ref[pl.ds(j, 1), :] = row * scale


def input_embedding(x_ids: jax.Array, table: jax.Array) -> jax.Array:
    """x_ids: int token ids of shape (batch, seq); table: (vocab, d_model) f32."""
    batch, seq = x_ids.shape
    vocab, d_model = table.shape
    n = batch * seq
    n_pad = pl.cdiv(n, TN) * TN

    # 1-D int32 ids in SMEM (no (N,1) VMEM operand); clamp to valid range.
    ids = jnp.clip(x_ids.reshape(-1).astype(jnp.int32), 0, vocab - 1)
    if n_pad != n:
        ids = jnp.pad(ids, (0, n_pad - n))

    # Pad the (tiny) table once to a lane-dense width of 128.
    table_p = jnp.pad(table.astype(jnp.float32), ((0, 0), (0, D_PAD - d_model)))

    out_padded = pl.pallas_call(
        _embedding_kernel,
        out_shape=jax.ShapeDtypeStruct((n_pad, D_PAD), jnp.float32),
        grid_spec=pltpu.PrefetchScalarGridSpec(
            num_scalar_prefetch=1,
            grid=(n_pad // TN,),
            in_specs=[
                # Full table resident in VMEM (8 KiB); for large vocab this would
                # instead stay in HBM (pl.ANY) with a DMA gather.
                pl.BlockSpec((vocab, D_PAD), lambda i, ids: (0, 0)),
            ],
            out_specs=pl.BlockSpec((TN, D_PAD), lambda i, ids: (i, 0)),
        ),
        compiler_params=pltpu.CompilerParams(
            dimension_semantics=("parallel",)),
    )(ids, table_p)

    return out_padded[:n, :d_model].reshape(batch, seq, d_model)


if __name__ == "__main__":
    key = jax.random.PRNGKey(0)
    k_ids, k_tab = jax.random.split(key)

    batch, seq = 2, 8
    x = jax.random.randint(k_ids, (batch, seq), 0, VOCAB_SIZE, dtype=jnp.int32)
    # Deterministic "parameter" init (nn.Embedding default ~ N(0,1)).
    embedding_table = jax.random.normal(k_tab, (VOCAB_SIZE, D_MODEL),
                                        dtype=jnp.float32)

    out = input_embedding(x, embedding_table)
    out = jax.block_until_ready(out)

    # Reference check in plain JAX.
    ref = embedding_table[x] * math.sqrt(D_MODEL)
    assert out.shape == (batch, seq, D_MODEL), out.shape
    assert jnp.allclose(out, ref, atol=1e-5), "mismatch vs reference"

    print("KERNEL_OK")
</pallas_src>

<mosaic_0001>
module attributes {stable_mosaic.version = 11 : i64} {
  func.func @_embedding_kernel(%arg0: i32, %arg1: memref<16xi32, #tpu.memory_space<smem>>, %arg2: memref<16x128xf32, #tpu.memory_space<vmem>>, %arg3: memref<8x128xf32, #tpu.memory_space<vmem>>) attributes {dimension_semantics = [#tpu.dimension_semantics<parallel>], iteration_bounds = array<i64: 2>, scalar_prefetch = 1 : i64, scratch_operands = 0 : i64, tpu.core_type = #tpu.core_type<tc>, window_params = [{pipeline_mode = #tpu.pipeline_mode<synchronous>, transform_indices = @transform_0, window_bounds = array<i64: 16, 128>}, {transform_indices = @transform_1, window_bounds = array<i64: 8, 128>}]} {
    %c8_i32 = arith.constant 8 : i32
    %0 = arith.muli %arg0, %c8_i32 : i32
    %c0_i32 = arith.constant 0 : i32
    %1 = arith.addi %0, %c0_i32 : i32
    %2 = arith.index_cast %1 : i32 to index
    %3 = memref.load %arg1[%2] : memref<16xi32, #tpu.memory_space<smem>>
    %4 = arith.index_cast %3 : i32 to index
    %c0 = arith.constant 0 : index
    %5 = vector.load %arg2[%4, %c0] : memref<16x128xf32, #tpu.memory_space<vmem>>, vector<1x128xf32>
    %cst = arith.constant 2.44948983 : f32
    %6 = vector.broadcast %cst : f32 to vector<1x128xf32>
    %7 = arith.mulf %5, %6 : vector<1x128xf32>
    %c0_0 = arith.constant 0 : index
    %c0_1 = arith.constant 0 : index
    %8 = vector.load %arg3[%c0_0, %c0_1] : memref<8x128xf32, #tpu.memory_space<vmem>>, vector<1x128xf32>
    tpu.vector_store %arg3[%c0_0, %c0_1], %7 {strides = array<i32>} : memref<8x128xf32, #tpu.memory_space<vmem>>, vector<1x128xf32>,
    %c1_i32 = arith.constant 1 : i32
    %9 = arith.addi %0, %c1_i32 : i32
    %10 = arith.index_cast %9 : i32 to index
    %11 = memref.load %arg1[%10] : memref<16xi32, #tpu.memory_space<smem>>
    %12 = arith.index_cast %11 : i32 to index
    %c0_2 = arith.constant 0 : index
    %13 = vector.load %arg2[%12, %c0_2] : memref<16x128xf32, #tpu.memory_space<vmem>>, vector<1x128xf32>
    %cst_3 = arith.constant 2.44948983 : f32
    %14 = vector.broadcast %cst_3 : f32 to vector<1x128xf32>
    %15 = arith.mulf %13, %14 : vector<1x128xf32>
    %c1 = arith.constant 1 : index
    %c0_4 = arith.constant 0 : index
    %16 = vector.load %arg3[%c1, %c0_4] : memref<8x128xf32, #tpu.memory_space<vmem>>, vector<1x128xf32>
    tpu.vector_store %arg3[%c1, %c0_4], %15 {strides = array<i32>} : memref<8x128xf32, #tpu.memory_space<vmem>>, vector<1x128xf32>,
    %c2_i32 = arith.constant 2 : i32
    %17 = arith.addi %0, %c2_i32 : i32
    %18 = arith.index_cast %17 : i32 to index
    %19 = memref.load %arg1[%18] : memref<16xi32, #tpu.memory_space<smem>>
    %20 = arith.index_cast %19 : i32 to index
    %c0_5 = arith.constant 0 : index
    %21 = vector.load %arg2[%20, %c0_5] : memref<16x128xf32, #tpu.memory_space<vmem>>, vector<1x128xf32>
    %cst_6 = arith.constant 2.44948983 : f32
    %22 = vector.broadcast %cst_6 : f32 to vector<1x128xf32>
    %23 = arith.mulf %21, %22 : vector<1x128xf32>
    %c2 = arith.constant 2 : index
    %c0_7 = arith.constant 0 : index
    %24 = vector.load %arg3[%c2, %c0_7] : memref<8x128xf32, #tpu.memory_space<vmem>>, vector<1x128xf32>
    tpu.vector_store %arg3[%c2, %c0_7], %23 {strides = array<i32>} : memref<8x128xf32, #tpu.memory_space<vmem>>, vector<1x128xf32>,
    %c3_i32 = arith.constant 3 : i32
    %25 = arith.addi %0, %c3_i32 : i32
    %26 = arith.index_cast %25 : i32 to index
    %27 = memref.load %arg1[%26] : memref<16xi32, #tpu.memory_space<smem>>
    %28 = arith.index_cast %27 : i32 to index
    %c0_8 = arith.constant 0 : index
    %29 = vector.load %arg2[%28, %c0_8] : memref<16x128xf32, #tpu.memory_space<vmem>>, vector<1x128xf32>
    %cst_9 = arith.constant 2.44948983 : f32
    %30 = vector.broadcast %cst_9 : f32 to vector<1x128xf32>
    %31 = arith.mulf %29, %30 : vector<1x128xf32>
    %c3 = arith.constant 3 : index
    %c0_10 = arith.constant 0 : index
    %32 = vector.load %arg3[%c3, %c0_10] : memref<8x128xf32, #tpu.memory_space<vmem>>, vector<1x128xf32>
    tpu.vector_store %arg3[%c3, %c0_10], %31 {strides = array<i32>} : memref<8x128xf32, #tpu.memory_space<vmem>>, vector<1x128xf32>,
    %c4_i32 = arith.constant 4 : i32
    %33 = arith.addi %0, %c4_i32 : i32
    %34 = arith.index_cast %33 : i32 to index
    %35 = memref.load %arg1[%34] : memref<16xi32, #tpu.memory_space<smem>>
    %36 = arith.index_cast %35 : i32 to index
    %c0_11 = arith.constant 0 : index
    %37 = vector.load %arg2[%36, %c0_11] : memref<16x128xf32, #tpu.memory_space<vmem>>, vector<1x128xf32>
    %cst_12 = arith.constant 2.44948983 : f32
    %38 = vector.broadcast %cst_12 : f32 to vector<1x128xf32>
    %39 = arith.mulf %37, %38 : vector<1x128xf32>
    %c4 = arith.constant 4 : index
    %c0_13 = arith.constant 0 : index
    %40 = vector.load %arg3[%c4, %c0_13] : memref<8x128xf32, #tpu.memory_space<vmem>>, vector<1x128xf32>
    tpu.vector_store %arg3[%c4, %c0_13], %39 {strides = array<i32>} : memref<8x128xf32, #tpu.memory_space<vmem>>, vector<1x128xf32>,
    %c5_i32 = arith.constant 5 : i32
    %41 = arith.addi %0, %c5_i32 : i32
    %42 = arith.index_cast %41 : i32 to index
    %43 = memref.load %arg1[%42] : memref<16xi32, #tpu.memory_space<smem>>
    %44 = arith.index_cast %43 : i32 to index
    %c0_14 = arith.constant 0 : index
    %45 = vector.load %arg2[%44, %c0_14] : memref<16x128xf32, #tpu.memory_space<vmem>>, vector<1x128xf32>
    %cst_15 = arith.constant 2.44948983 : f32
    %46 = vector.broadcast %cst_15 : f32 to vector<1x128xf32>
    %47 = arith.mulf %45, %46 : vector<1x128xf32>
    %c5 = arith.constant 5 : index
    %c0_16 = arith.constant 0 : index
    %48 = vector.load %arg3[%c5, %c0_16] : memref<8x128xf32, #tpu.memory_space<vmem>>, vector<1x128xf32>
    tpu.vector_store %arg3[%c5, %c0_16], %47 {strides = array<i32>} : memref<8x128xf32, #tpu.memory_space<vmem>>, vector<1x128xf32>,
    %c6_i32 = arith.constant 6 : i32
    %49 = arith.addi %0, %c6_i32 : i32
    %50 = arith.index_cast %49 : i32 to index
    %51 = memref.load %arg1[%50] : memref<16xi32, #tpu.memory_space<smem>>
    %52 = arith.index_cast %51 : i32 to index
    %c0_17 = arith.constant 0 : index
    %53 = vector.load %arg2[%52, %c0_17] : memref<16x128xf32, #tpu.memory_space<vmem>>, vector<1x128xf32>
    %cst_18 = arith.constant 2.44948983 : f32
    %54 = vector.broadcast %cst_18 : f32 to vector<1x128xf32>
    %55 = arith.mulf %53, %54 : vector<1x128xf32>
    %c6 = arith.constant 6 : index
    %c0_19 = arith.constant 0 : index
    %56 = vector.load %arg3[%c6, %c0_19] : memref<8x128xf32, #tpu.memory_space<vmem>>, vector<1x128xf32>
    tpu.vector_store %arg3[%c6, %c0_19], %55 {strides = array<i32>} : memref<8x128xf32, #tpu.memory_space<vmem>>, vector<1x128xf32>,
    %c7_i32 = arith.constant 7 : i32
    %57 = arith.addi %0, %c7_i32 : i32
    %58 = arith.index_cast %57 : i32 to index
    %59 = memref.load %arg1[%58] : memref<16xi32, #tpu.memory_space<smem>>
    %60 = arith.index_cast %59 : i32 to index
    %c0_20 = arith.constant 0 : index
    %61 = vector.load %arg2[%60, %c0_20] : memref<16x128xf32, #tpu.memory_space<vmem>>, vector<1x128xf32>
    %cst_21 = arith.constant 2.44948983 : f32
    %62 = vector.broadcast %cst_21 : f32 to vector<1x128xf32>
    %63 = arith.mulf %61, %62 : vector<1x128xf32>
    %c7 = arith.constant 7 : index
    %c0_22 = arith.constant 0 : index
    %64 = vector.load %arg3[%c7, %c0_22] : memref<8x128xf32, #tpu.memory_space<vmem>>, vector<1x128xf32>
    tpu.vector_store %arg3[%c7, %c0_22], %63 {strides = array<i32>} : memref<8x128xf32, #tpu.memory_space<vmem>>, vector<1x128xf32>,
    return
  }
  func.func @transform_0(%arg0: i32, %arg1: memref<16xi32, #tpu.memory_space<smem>>) -> (i32, i32) {
    %c0_i32 = arith.constant 0 : i32
    %c0_i32_0 = arith.constant 0 : i32
    %c0_i32_1 = arith.constant 0 : i32
    return %c0_i32, %c0_i32_0 : i32, i32
  }
  func.func @transform_1(%arg0: i32, %arg1: memref<16xi32, #tpu.memory_space<smem>>) -> (i32, i32) {
    %c0_i32 = arith.constant 0 : i32
    %c0_i32_0 = arith.constant 0 : i32
    return %arg0, %c0_i32 : i32, i32
  }
}

</mosaic_0001>

<llo_original>
// kernel: tpu_custom_call.1
$region0: #{tpu_custom_call.1}
  #allocation0 [shape = 'u32[]', space=smem, size = 0x4, offset = 0x4, fixed_abs, tag = 'smem constant byte address 0x4 - core index']
  #allocation1 [shape = 'u32[144,128]{1,0:T(1,128)}', space=vmem, size = 0x12000, scoped, tag = 'internal scratch']
  #allocation2 [shape = 's32[1]{0}', space=sflag, size = 0x4, scoped, tag = 'scoped memory for tpu_custom_call.1']
  #allocation3 [shape = 'u8[512]{0}', space=smem, size = 0x200, scoped, tag = 'prefetched SMEM operand 0']
  %s0 = inlined_call_operand.hbm [shape: s32[16], index: 0, kind: input, shape index: {}]
  %s1 = inlined_call_operand.hbm [shape: f32[16,128], index: 1, kind: input, shape index: {}]
  %s2 = inlined_call_operand.hbm [shape: f32[16,128], index: 2, kind: output, shape index: {}]
  %s3 = sld [smem:[#allocation0]]
  $region41: #{tpu_custom_call.1} parent=0
    _
  %s5 = ssub.s32 1, %s3
  %s6 = scalar_select 0, %s5, %s3
  %8 = dma.hbm_to_smem %s0, 16, [#allocation3], [#allocation2]
  %9 = dma.done [#allocation2], 16
  %10 = sfence
  $region1: #{tpu_custom_call.1} parent=0
    #allocation4 [shape = 'u8[8192]{0}', space=vmem, size = 0x2000, scoped, tag = 'input window, operand 1, single buffered']
    #allocation5 [shape = 's32[2]{0}', space=sflag, size = 0x8, scoped, tag = 'scoped memory for tpu_custom_call.1']
    #allocation6 [shape = 's32[2]{0}', space=sflag, size = 0x8, scoped, tag = 'scoped memory for tpu_custom_call.1']
    #allocation7 [shape = 'u8[8192]{0}', space=vmem, size = 0x2000, scoped, tag = 'output window, operand 0']
    %11 = vsyncpa [#allocation5], 0
    %12 = vsyncpa [#allocation6], 0
    %s13 = scalar_lea.sflag [#allocation6], 1
    %14 = vsyncpa %s13, 0
    loop: start=0, step=1, limit=4
    $region2: #{tpu_custom_call.1} parent=1 // loop_pre_header
      _
    $region3: #{tpu_custom_call.1} parent=1 // loop_header
      %s16 = sphi 0, %s20
      %p17 = scmp.ge.s32.totalorder %s16, 4
      %s24 = sphi 0, %s24
      %s26 = sphi 0, %s24
      %s27 = sphi 0, %s26
      %s41 = sphi 0, %s27
      %s47 = sphi 0, %s49
      %s50 = sphi 0, %s47
      %s51 = sphi 0, %s50
      %s67 = sphi 0, %s51
    $region4: #{tpu_custom_call.1} parent=1 // loop_header_branch
      %19 = sbr.rel (%p17) target = $region8
    $region5: #{tpu_custom_call.1} parent=1 // loop_body
      %s21 = ssub.s32 %s16, 1
      %s22 = ssub.s32 %s16, 2
      %s23 = sadd.s32 %s16, 1
      %s25 = sadd.s32 %s24, 1
      %p28 = scmp.eq.s32.totalorder %s16, 1
      %p29 = scmp.ne.s32.totalorder %s24, %s26
      %p30 = scmp.eq.s32.totalorder %s16, 0
      %p31 = por %p29, %p30
      %p32 = scmp.ne.s32.totalorder %s24, %s26
      %p33 = scmp.eq.s32.totalorder %s21, 1
      %p34 = por %p32, %p33
      %p35 = scmp.ne.s32.totalorder %s26, %s27
      %p36 = scmp.eq.s32.totalorder %s21, 0
      %p37 = por %p35, %p36
      %p38 = scmp.ne.s32.totalorder %s26, %s27
      %p39 = scmp.eq.s32.totalorder %s22, 1
      %p40 = por %p38, %p39
      %p42 = scmp.ne.s32.totalorder %s27, %s41
      %p43 = scmp.eq.s32.totalorder %s22, 0
      %p44 = por %p42, %p43
      %s45 = ssub.s32 %s16, %s23
      %p46 = scmp.eq.s32.totalorder %s45, 0
      %s48 = sadd.s32 %s47, 1
      %s49 = scalar_select %p46, %s47, %s48
      %p52 = pneg %p46
      %p53 = scmp.eq.s32.totalorder %s16, 1
      %p54 = por %p52, %p53
      %p55 = scmp.ne.s32.totalorder %s47, %s50
      %p56 = scmp.eq.s32.totalorder %s16, 0
      %p57 = por %p55, %p56
      %p58 = scmp.ne.s32.totalorder %s47, %s50
      %p59 = scmp.eq.s32.totalorder %s21, 1
      %p60 = por %p58, %p59
      %p61 = scmp.ne.s32.totalorder %s50, %s51
      %p62 = scmp.eq.s32.totalorder %s21, 0
      %p63 = por %p61, %p62
      %p64 = scmp.ne.s32.totalorder %s50, %s51
      %p65 = scmp.eq.s32.totalorder %s22, 1
      %p66 = por %p64, %p65
      %p68 = scmp.ne.s32.totalorder %s51, %s67
      %p69 = scmp.eq.s32.totalorder %s22, 0
      %p70 = por %p68, %p69
      %p71 = scmp.le.s32.totalorder 1, %s16
      %p72 = scmp.lt.s32.totalorder %s16, 3
      %p73 = pnand %p71, %p72
      %p74 = pneg %p73
      // Predicated region
      $region9: #{tpu_custom_call.1} parent=5 // pred_check
        _
      $region10: #{tpu_custom_call.1} parent=5 // pred_check_branch
        %76 = sbr.rel (%p73) target = $region12
      $region11: #{tpu_custom_call.1} parent=5 // pred_region
        %s77 = ssub.s32 %s16, 1
        // Predicated region
        $region13: #{tpu_custom_call.1} parent=11 // pred_check
          %p78 = pneg %p37
        $region14: #{tpu_custom_call.1} parent=11 // pred_check_branch
          %80 = sbr.rel (%p78) target = $region16
        $region15: #{tpu_custom_call.1} parent=11 // pred_region
          %s82 = ssub.s32 256, 256
          %83 = vsyncadd [#allocation5], %s82
          %s84 = sshll.u32 [#allocation4], 4
          %s85 = int_to_ptr.vmem [resolvable:$true] %s84
          %90 = dma.hbm_to_vmem [thread:$0]  %s1, 256, %s85, [#allocation5], 128, 128, 8
        $region16: #{tpu_custom_call.1} parent=11 // pred_fallthru
          _
      $region12: #{tpu_custom_call.1} parent=5 // pred_fallthru
        _
      %p91 = scmp.lt.s32.totalorder %s16, 2
      // Predicated region
      $region17: #{tpu_custom_call.1} parent=5 // pred_check
        %p92 = pneg %p91
      $region18: #{tpu_custom_call.1} parent=5 // pred_check_branch
        %94 = sbr.rel (%p92) target = $region20
      $region19: #{tpu_custom_call.1} parent=5 // pred_region
        _
      $region20: #{tpu_custom_call.1} parent=5 // pred_fallthru
        _
      %p95 = scmp.le.s32.totalorder 1, %s16
      %p96 = scmp.lt.s32.totalorder %s16, 3
      %p97 = pnand %p95, %p96
      %p98 = pneg %p97
      // Predicated region
      $region21: #{tpu_custom_call.1} parent=5 // pred_check
        _
      $region22: #{tpu_custom_call.1} parent=5 // pred_check_branch
        %100 = sbr.rel (%p97) target = $region24
      $region23: #{tpu_custom_call.1} parent=5 // pred_region
        %s101 = ssub.s32 %s16, 1
        // Predicated region
        $region25: #{tpu_custom_call.1} parent=23 // pred_check
          %p102 = pneg %p37
        $region26: #{tpu_custom_call.1} parent=23 // pred_check_branch
          %104 = sbr.rel (%p102) target = $region28
        $region27: #{tpu_custom_call.1} parent=23 // pred_region
          %105 = dma.done [#allocation5], 256
        $region28: #{tpu_custom_call.1} parent=23 // pred_fallthru
          _
        %p106 = pneg %p37
        %p107 = pneg %p34
        %p108 = pneg %p63
        %p109 = pneg %p60
        %s110 = sand.u32 %s50, 1
        %s111 = scalar_lea.sflag [#allocation6], %s110
        %s112 = sand.u32 %s50, 1
        %s113 = smul.addr %s112, 8
        %s114 = scalar_lea.vmem [#allocation7], %s113
        %s115 = smul.u32 %s21, 8
        %s116 = sld [smem:[#allocation3 + %s115]]
        %s117 = scalar_lea.vmem [#allocation4], %s116
        %v118 = vld [vmem:[%s117] sm:$0x1]
        %v119 = vmul.f32 %v118, 2.4494898
        %120 = vst [vmem:[%s114] sm:$0x1] %v119
        %s121 = sadd.s32 %s115, 1
        %s122 = sld [smem:[#allocation3 + %s121]]
        %s123 = scalar_lea.vmem [#allocation4], %s122
        %v124 = vld [vmem:[%s123] sm:$0x1]
        %v125 = vmul.f32 %v124, 2.4494898
        %126 = vst [vmem:[%s114 + $0x1] sm:$0x1] %v125
        %s127 = sadd.s32 %s115, 2
        %s128 = sld [smem:[#allocation3 + %s127]]
        %s129 = scalar_lea.vmem [#allocation4], %s128
        %v130 = vld [vmem:[%s129] sm:$0x1]
        %v131 = vmul.f32 %v130, 2.4494898
        %132 = vst [vmem:[%s114 + $0x2] sm:$0x1] %v131
        %s133 = sadd.s32 %s115, 3
        %s134 = sld [smem:[#allocation3 + %s133]]
        %s135 = scalar_lea.vmem [#allocation4], %s134
        %v136 = vld [vmem:[%s135] sm:$0x1]
        %v137 = vmul.f32 %v136, 2.4494898
        %138 = vst [vmem:[%s114 + $0x3] sm:$0x1] %v137
        %s139 = sadd.s32 %s115, 4
        %s140 = sld [smem:[#allocation3 + %s139]]
        %s141 = scalar_lea.vmem [#allocation4], %s140
        %v142 = vld [vmem:[%s141] sm:$0x1]
        %v143 = vmul.f32 %v142, 2.4494898
        %144 = vst [vmem:[%s114 + $0x4] sm:$0x1] %v143
        %s145 = sadd.s32 %s115, 5
        %s146 = sld [smem:[#allocation3 + %s145]]
        %s147 = scalar_lea.vmem [#allocation4], %s146
        %v148 = vld [vmem:[%s147] sm:$0x1]
        %v149 = vmul.f32 %v148, 2.4494898
        %150 = vst [vmem:[%s114 + $0x5] sm:$0x1] %v149
        %s151 = sadd.s32 %s115, 6
        %s152 = sld [smem:[#allocation3 + %s151]]
        %s153 = scalar_lea.vmem [#allocation4], %s152
        %v154 = vld [vmem:[%s153] sm:$0x1]
        %v155 = vmul.f32 %v154, 2.4494898
        %156 = vst [vmem:[%s114 + $0x6] sm:$0x1] %v155
        %s157 = sadd.s32 %s115, 7
        %s158 = sld [smem:[#allocation3 + %s157]]
        %s159 = scalar_lea.vmem [#allocation4], %s158
        %v160 = vld [vmem:[%s159] sm:$0x1]
        %v161 = vmul.f32 %v160, 2.4494898
        %162 = vst [vmem:[%s114 + $0x7] sm:$0x1] %v161
        %s163 = sand.u32 %s50, 1
        %s164 = scalar_lea.sflag [#allocation6], %s163
        %s165 = sand.u32 %s50, 1
        %s166 = smul.addr %s165, 8
        %s167 = scalar_lea.vmem [#allocation7], %s166
        // Predicated region
        $region29: #{tpu_custom_call.1} parent=23 // pred_check
          %p168 = pneg %p60
        $region30: #{tpu_custom_call.1} parent=23 // pred_check_branch
          %170 = sbr.rel (%p168) target = $region32
        $region31: #{tpu_custom_call.1} parent=23 // pred_region
          %s172 = ssub.s32 128, 128
          %173 = vsyncadd %s164, %s172
          %s174 = smul.addr %s21, 128
          %s175 = scalar_lea.hbm %s2, %s174
          %s177 = sshll.u32 %s167, 4
          %s178 = int_to_ptr.vmem [resolvable:$true] %s177
          %180 = dma.vmem_to_hbm [thread:$0]  %s178, 128, %s175, %s164
        $region32: #{tpu_custom_call.1} parent=23 // pred_fallthru
          _
      $region24: #{tpu_custom_call.1} parent=5 // pred_fallthru
        _
      %p181 = scmp.le.s32.totalorder 2, %s16
      // Predicated region
      $region33: #{tpu_custom_call.1} parent=5 // pred_check
        %p182 = pneg %p181
      $region34: #{tpu_custom_call.1} parent=5 // pred_check_branch
        %184 = sbr.rel (%p182) target = $region36
      $region35: #{tpu_custom_call.1} parent=5 // pred_region
        %s185 = ssub.s32 %s16, 2
        // Predicated region
        $region37: #{tpu_custom_call.1} parent=35 // pred_check
          %p186 = pneg %p66
        $region38: #{tpu_custom_call.1} parent=35 // pred_check_branch
          %188 = sbr.rel (%p186) target = $region40
        $region39: #{tpu_custom_call.1} parent=35 // pred_region
          %s189 = sand.u32 %s51, 1
          %s190 = scalar_lea.sflag [#allocation6], %s189
          %s191 = sand.u32 %s51, 1
          %s192 = smul.addr %s191, 8
          %s193 = scalar_lea.vmem [#allocation7], %s192
          %194 = dma.done %s190, 128
        $region40: #{tpu_custom_call.1} parent=35 // pred_fallthru
          _
      $region36: #{tpu_custom_call.1} parent=5 // pred_fallthru
        _
    $region6: #{tpu_custom_call.1} parent=1 // loop_footer
      %s20 = sadd.s32 1, %s16
    $region7: #{tpu_custom_call.1} parent=1 // loop_footer_branch
      %15 = sbr.rel target = $region3
    $region8: #{tpu_custom_call.1} parent=1 // loop_exit
      _
    %195 = vsyncpa [#allocation5], 1
    %s196 = scalar_lea.sflag [#allocation5], 1
    %197 = vsyncpa %s196, 1
    %198 = vsyncpa [#allocation6], 1
    %s199 = scalar_lea.sflag [#allocation6], 1
    %200 = vsyncpa %s199, 1

</llo_original>
